<compile_context>
chip_gen: v7x
topology: tpu7x:2x2x1
jax: 0.10.0
libtpu: 0.0.40
codegen_flags: <defaults>
</compile_context>

<pallas_src>
import functools

import jax
import jax.numpy as jnp
from jax.experimental import pallas as pl
from jax.experimental.pallas import tpu as pltpu


def _encoder_tail_kernel(*refs, add_eps, use_dropout, inv_keep, ln_eps):
    """Fused Encoder tail for one (block_b, S, C) block of batch rows."""
    o_ref = refs[-1]
    it = iter(refs[:-1])
    x_ref = next(it)
    eps1_ref = next(it) if add_eps else None
    eps2_ref = next(it) if add_eps else None
    mask_ref = next(it) if use_dropout else None
    (w1_ref, b1_ref, wc_ref, bc_ref, w2_ref, b2_ref,
     we_ref, be_ref, wo_ref, bo_ref, ga_ref, gb_ref) = it

    f32, bf16 = jnp.float32, jnp.bfloat16
    Bb, S, C = x_ref.shape
    M = Bb * S

    # Residual path stays f32; matmul operands are bf16 (single-pass MXU,
    # f32 accumulation via preferred_element_type).
    x = x_ref[...].reshape(M, C)                                     # (M, C) f32

    we = we_ref[...]                                                 # bf16 (C, C)
    be = be_ref[...]                                                 # f32  (1, C)

    def addeps(v, eps_ref):
        # AddEps: v + tanh(Linear(randn_like(v))); eps streamed in as bf16.
        eps = eps_ref[...].reshape(M, C)
        lin = jnp.dot(eps, we, preferred_element_type=f32) + be
        return v + jnp.tanh(lin)

    # --- dot_cnn1: Conv1d(C, C, k=1) + Softplus (per-position channel linear) ---
    h_in = addeps(x, eps1_ref) if add_eps else x
    h = jax.nn.softplus(
        jnp.dot(h_in.astype(bf16), w1_ref[...], preferred_element_type=f32)
        + b1_ref[...])
    z = addeps(h, eps2_ref) if add_eps else h                        # (M, C) f32

    # --- cnn_layer: causal Conv1d(C, 2C, k=5, padding=4)[:, :, :-4] + Softplus ---
    # Fused into a single K=5C matmul: unfold z to (M, 5C) and multiply by
    # wc reshaped to (5C, 2C) in the wrapper.  Zero padding is applied per
    # batch row so batch boundaries see the correct causal halo.
    z3 = z.reshape(Bb, S, C).astype(bf16)
    z_pad = jnp.concatenate([jnp.zeros((Bb, 4, C), bf16), z3], axis=1)   # (Bb, S+4, C)
    z_unf = jnp.concatenate([z_pad[:, k:k + S, :] for k in range(5)],
                            axis=-1).reshape(M, 5 * C)                   # (M, 5C)
    u = jax.nn.softplus(
        jnp.dot(z_unf, wc_ref[...], preferred_element_type=f32)
        + bc_ref[...])                                                   # (M, 2C)

    # --- dot_cnn2: Conv1d(2C, C, k=1) + Softplus ---
    v = jax.nn.softplus(
        jnp.dot(u.astype(bf16), w2_ref[...], preferred_element_type=f32)
        + b2_ref[...])                                                   # (M, C)

    # --- residual + dropout (bf16 {0,1} keep-mask, static inverted scale) ---
    y = x + v
    if use_dropout:
        y = y * (mask_ref[...].reshape(M, C).astype(f32) * inv_keep)

    # --- linear_o ---
    y = (jnp.dot(y.astype(bf16), wo_ref[...], preferred_element_type=f32)
         + bo_ref[...])

    # --- LayerNorm (unbiased std, eps added to std) ---
    # One pass for mean + sum-of-squares; divide goes to EUP via approx recip.
    sum_y = jnp.sum(y, axis=-1, keepdims=True)
    sum_yy = jnp.sum(y * y, axis=-1, keepdims=True)
    mean = sum_y * (1.0 / C)
    ssq = jnp.maximum(sum_yy - sum_y * mean, 0.0)
    std = jnp.sqrt(ssq * (1.0 / (C - 1)))
    inv = pl.reciprocal(std + ln_eps, approx=True)
    out = ga_ref[...] * (y - mean) * inv + gb_ref[...]

    o_ref[...] = out.reshape(Bb, S, C).astype(o_ref.dtype)


def _pick_block_b(B, S, target_rows=256):
    """Largest divisor of B with block_b*S <= ~target MXU rows, keeping >= 2
    grid steps when B > 1 so a dual-TC chip (v7x) gets work on both cores."""
    best = 1
    for d in range(1, B + 1):
        if B % d:
            continue
        if d * S > max(S, target_rows):
            continue
        if B > 1 and B // d < 2:
            continue
        best = d
    return best


def encoder_forward(x, params, *, add_eps=False, training=False, p=0.1,
                    eps1=None, eps2=None, keep_mask=None, ln_eps=1e-6,
                    block_b=None):
    """Pallas forward of the Encoder tail.  x: (B, S, C) float32.

    # TODO(synk): self.layers (the cloned EncoderLayer stack) is an external
    # constructor argument not defined in the spec; it is treated as identity
    # here, and `mask` (consumed only by those layers) is therefore unused.
    """
    B, S, C = x.shape
    use_dropout = bool(training) and p > 0.0
    bf16, f32 = jnp.bfloat16, jnp.float32

    if block_b is None:
        block_b = _pick_block_b(B, S)
    assert B % block_b == 0, "block_b must divide the batch"
    grid = (B // block_b,)

    act_spec = pl.BlockSpec((block_b, S, C), lambda b: (b, 0, 0))

    inputs, in_specs = [x.astype(f32)], [act_spec]
    if add_eps:
        assert eps1 is not None and eps2 is not None
        inputs += [eps1.astype(bf16), eps2.astype(bf16)]
        in_specs += [act_spec, act_spec]
    if use_dropout:
        assert keep_mask is not None
        inputs += [keep_mask.astype(bf16)]
        in_specs += [act_spec]

    # Weights: matmul operands cast once to bf16 here (not per grid step in
    # the kernel); biases / LN params stay f32, lane-major as (1, N).  All use
    # constant index maps so they stay resident in VMEM across grid steps.
    weight_arrays = [
        params["w1"].astype(bf16), params["b1"].reshape(1, -1).astype(f32),
        params["wc"].reshape(5 * C, 2 * C).astype(bf16),              # fused conv weight
        params["bc"].reshape(1, -1).astype(f32),
        params["w2"].astype(bf16), params["b2"].reshape(1, -1).astype(f32),
        params["we"].astype(bf16), params["be"].reshape(1, -1).astype(f32),
        params["wo"].astype(bf16), params["bo"].reshape(1, -1).astype(f32),
        params["ln_a"].reshape(1, -1).astype(f32),
        params["ln_b"].reshape(1, -1).astype(f32),
    ]
    for w in weight_arrays:
        inputs.append(w)
        in_specs.append(pl.BlockSpec(w.shape, lambda b, n=w.ndim: (0,) * n))

    kernel = functools.partial(
        _encoder_tail_kernel, add_eps=bool(add_eps), use_dropout=use_dropout,
        inv_keep=float(1.0 / (1.0 - p)) if use_dropout else 1.0,
        ln_eps=float(ln_eps))

    return pl.pallas_call(
        kernel,
        out_shape=jax.ShapeDtypeStruct((B, S, C), x.dtype),
        grid=grid,
        in_specs=in_specs,
        out_specs=act_spec,
        compiler_params=pltpu.CompilerParams(
            dimension_semantics=("parallel",)),
    )(*inputs)


def encoder_tail_reference(x, params, eps1=None, eps2=None, keep_mask=None, *,
                           add_eps=False, training=False, p=0.1, ln_eps=1e-6):
    """Pure-JAX f32 reference with identical math (same external randomness)."""
    B, S, C = x.shape

    def addeps(v, eps):
        return v + jnp.tanh(eps @ params["we"] + params["be"])

    h_in = addeps(x, eps1) if add_eps else x
    h = jax.nn.softplus(h_in @ params["w1"] + params["b1"])
    z = addeps(h, eps2) if add_eps else h

    z_pad = jnp.pad(z, ((0, 0), (4, 0), (0, 0)))
    acc = jnp.zeros((B, S, 2 * C), jnp.float32)
    for k in range(5):
        acc = acc + z_pad[:, k:k + S, :] @ params["wc"][k]
    u = jax.nn.softplus(acc + params["bc"])

    v = jax.nn.softplus(u @ params["w2"] + params["b2"])
    y = x + v
    if training and p > 0.0:
        y = y * keep_mask / (1.0 - p)
    y = y @ params["wo"] + params["bo"]
    mean = y.mean(-1, keepdims=True)
    std = jnp.sqrt(((y - mean) ** 2).sum(-1, keepdims=True) / (C - 1))
    return params["ln_a"] * (y - mean) / (std + ln_eps) + params["ln_b"]


if __name__ == "__main__":
    # Shapes implied by the forward: x is (batch, seq_len, in_shape).
    B, S, C = 2, 8, 32
    P_DROP = 0.1

    key = jax.random.PRNGKey(0)
    keys = jax.random.split(key, 16)
    scale = 0.1

    x = jax.random.normal(keys[0], (B, S, C), jnp.float32)
    params = {
        "w1":  jax.random.normal(keys[1], (C, C)) * scale,          # dot_cnn1 (k=1)
        "b1":  jax.random.normal(keys[2], (C,)) * scale,
        "wc":  jax.random.normal(keys[3], (5, C, 2 * C)) * scale,   # cnn_layer (k=5)
        "bc":  jax.random.normal(keys[4], (2 * C,)) * scale,
        "w2":  jax.random.normal(keys[5], (2 * C, C)) * scale,      # dot_cnn2 (k=1)
        "b2":  jax.random.normal(keys[6], (C,)) * scale,
        "we":  jax.random.normal(keys[7], (C, C)) * scale,          # AddEps linear
        "be":  jax.random.normal(keys[8], (C,)) * scale,
        "wo":  jax.random.normal(keys[9], (C, C)) * scale,          # linear_o
        "bo":  jax.random.normal(keys[10], (C,)) * scale,
        "ln_a": jnp.ones((C,), jnp.float32),                        # LayerNorm a_2
        "ln_b": jnp.zeros((C,), jnp.float32),                       # LayerNorm b_2
    }
    # Randomness for AddEps (torch.randn_like) and dropout, drawn in the
    # wrapper (bf16-encoded to halve streaming bandwidth) and shared with the
    # reference so both paths consume the exact same samples.
    eps1 = jax.random.normal(keys[11], (B, S, C), jnp.float32).astype(jnp.bfloat16)
    eps2 = jax.random.normal(keys[12], (B, S, C), jnp.float32).astype(jnp.bfloat16)
    keep = (jax.random.uniform(keys[13], (B, S, C)) >= P_DROP).astype(jnp.float32)

    # Path 1: add_eps=False, eval mode (fully deterministic).
    out1 = jax.block_until_ready(
        encoder_forward(x, params, add_eps=False, training=False, p=P_DROP))
    ref1 = encoder_tail_reference(x, params, add_eps=False, training=False, p=P_DROP)
    assert jnp.allclose(out1, ref1, atol=5e-2, rtol=5e-2), "mismatch (add_eps=False, eval)"

    # Path 2: add_eps=True, training mode (AddEps + dropout, shared randomness).
    out2 = jax.block_until_ready(
        encoder_forward(x, params, add_eps=True, training=True, p=P_DROP,
                        eps1=eps1, eps2=eps2, keep_mask=keep))
    ref2 = encoder_tail_reference(x, params, eps1.astype(jnp.float32),
                                  eps2.astype(jnp.float32), keep,
                                  add_eps=True, training=True, p=P_DROP)
    assert jnp.allclose(out2, ref2, atol=5e-2, rtol=5e-2), "mismatch (add_eps=True, train)"

    print("KERNEL_OK")
</pallas_src>

<mosaic_0001>
module attributes {stable_mosaic.version = 11 : i64} {
  func.func @_encoder_tail_kernel(%arg0: i32, %arg1: memref<1x8x32xf32, #tpu.memory_space<vmem>>, %arg2: memref<32x32xbf16, #tpu.memory_space<vmem>>, %arg3: memref<1x32xf32, #tpu.memory_space<vmem>>, %arg4: memref<160x64xbf16, #tpu.memory_space<vmem>>, %arg5: memref<1x64xf32, #tpu.memory_space<vmem>>, %arg6: memref<64x32xbf16, #tpu.memory_space<vmem>>, %arg7: memref<1x32xf32, #tpu.memory_space<vmem>>, %arg8: memref<32x32xbf16, #tpu.memory_space<vmem>>, %arg9: memref<1x32xf32, #tpu.memory_space<vmem>>, %arg10: memref<32x32xbf16, #tpu.memory_space<vmem>>, %arg11: memref<1x32xf32, #tpu.memory_space<vmem>>, %arg12: memref<1x32xf32, #tpu.memory_space<vmem>>, %arg13: memref<1x32xf32, #tpu.memory_space<vmem>>, %arg14: memref<1x8x32xf32, #tpu.memory_space<vmem>>) attributes {dimension_semantics = [#tpu.dimension_semantics<parallel>], iteration_bounds = array<i64: 2>, scalar_prefetch = 0 : i64, scratch_operands = 0 : i64, tpu.core_type = #tpu.core_type<tc>, window_params = [{transform_indices = @transform_0, window_bounds = array<i64: 1, 8, 32>}, {pipeline_mode = #tpu.pipeline_mode<synchronous>, transform_indices = @transform_1, window_bounds = array<i64: 32, 32>}, {pipeline_mode = #tpu.pipeline_mode<synchronous>, transform_indices = @transform_2, window_bounds = array<i64: 1, 32>}, {pipeline_mode = #tpu.pipeline_mode<synchronous>, transform_indices = @transform_3, window_bounds = array<i64: 160, 64>}, {pipeline_mode = #tpu.pipeline_mode<synchronous>, transform_indices = @transform_4, window_bounds = array<i64: 1, 64>}, {pipeline_mode = #tpu.pipeline_mode<synchronous>, transform_indices = @transform_5, window_bounds = array<i64: 64, 32>}, {pipeline_mode = #tpu.pipeline_mode<synchronous>, transform_indices = @transform_6, window_bounds = array<i64: 1, 32>}, {pipeline_mode = #tpu.pipeline_mode<synchronous>, transform_indices = @transform_7, window_bounds = array<i64: 32, 32>}, {pipeline_mode = #tpu.pipeline_mode<synchronous>, transform_indices = @transform_8, window_bounds = array<i64: 1, 32>}, {pipeline_mode = #tpu.pipeline_mode<synchronous>, transform_indices = @transform_9, window_bounds = array<i64: 32, 32>}, {pipeline_mode = #tpu.pipeline_mode<synchronous>, transform_indices = @transform_10, window_bounds = array<i64: 1, 32>}, {pipeline_mode = #tpu.pipeline_mode<synchronous>, transform_indices = @transform_11, window_bounds = array<i64: 1, 32>}, {pipeline_mode = #tpu.pipeline_mode<synchronous>, transform_indices = @transform_12, window_bounds = array<i64: 1, 32>}, {transform_indices = @transform_13, window_bounds = array<i64: 1, 8, 32>}]} {
    %c0 = arith.constant 0 : index
    %c0_0 = arith.constant 0 : index
    %c0_1 = arith.constant 0 : index
    %0 = vector.load %arg1[%c0, %c0_0, %c0_1] : memref<1x8x32xf32, #tpu.memory_space<vmem>>, vector<1x8x32xf32>
    %1 = vector.shape_cast %0 : vector<1x8x32xf32> to vector<8x32xf32>
    %2 = arith.truncf %1 : vector<8x32xf32> to vector<8x32xbf16>
    %c0_2 = arith.constant 0 : index
    %c0_3 = arith.constant 0 : index
    %3 = vector.load %arg2[%c0_2, %c0_3] : memref<32x32xbf16, #tpu.memory_space<vmem>>, vector<32x32xbf16>
    %cst = arith.constant dense<0.000000e+00> : vector<8x32xf32>
    %4 = tpu.matmul %2, %3, %cst {dimension_numbers = #tpu.dot_dimension_numbers<[1], [0], [0], [1], [0, 0, 1, 1], [], []>} : vector<8x32xbf16>, vector<32x32xbf16>, vector<8x32xf32> -> vector<8x32xf32>
    %c0_4 = arith.constant 0 : index
    %c0_5 = arith.constant 0 : index
    %5 = vector.load %arg3[%c0_4, %c0_5] : memref<1x32xf32, #tpu.memory_space<vmem>>, vector<1x32xf32>
    %6 = vector.broadcast %5 : vector<1x32xf32> to vector<8x32xf32>
    %7 = arith.addf %4, %6 : vector<8x32xf32>
    %cst_6 = arith.constant 0.000000e+00 : f32
    %8 = vector.broadcast %cst_6 : f32 to vector<8x32xf32>
    %9 = arith.maximumf %7, %8 : vector<8x32xf32>
    %10 = vector.broadcast %cst_6 : f32 to vector<8x32xf32>
    %11 = arith.subf %7, %10 : vector<8x32xf32>
    %12 = arith.cmpf one, %11, %11 : vector<8x32xf32>
    %13 = vector.broadcast %cst_6 : f32 to vector<8x32xf32>
    %14 = arith.addf %7, %13 : vector<8x32xf32>
    %15 = math.absf %11 : vector<8x32xf32>
    %cst_7 = arith.constant 0.000000e+00 : f32
    %16 = vector.broadcast %cst_7 : f32 to vector<8x32xf32>
    %17 = arith.subf %16, %15 : vector<8x32xf32>
    %18 = math.exp %17 : vector<8x32xf32>
    %19 = math.log1p %18 : vector<8x32xf32>
    %20 = arith.addf %9, %19 : vector<8x32xf32>
    %21 = arith.select %12, %14, %20 : vector<8x32xi1>, vector<8x32xf32>
    %22 = vector.shape_cast %21 : vector<8x32xf32> to vector<1x8x32xf32>
    %23 = arith.truncf %22 : vector<1x8x32xf32> to vector<1x8x32xbf16>
    %cst_8 = arith.constant 0.000000e+00 : bf16
    %24 = vector.broadcast %cst_8 : bf16 to vector<1x4x32xbf16>
    %25 = tpu.concatenate %24, %23 in 1 : vector<1x4x32xbf16>, vector<1x8x32xbf16> -> vector<1x12x32xbf16>
    %26 = vector.extract_strided_slice %25 {offsets = [0, 0, 0], sizes = [1, 8, 32], strides = [1, 1, 1]} : vector<1x12x32xbf16> to vector<1x8x32xbf16>
    %27 = vector.extract_strided_slice %25 {offsets = [0, 1, 0], sizes = [1, 8, 32], strides = [1, 1, 1]} : vector<1x12x32xbf16> to vector<1x8x32xbf16>
    %28 = vector.extract_strided_slice %25 {offsets = [0, 2, 0], sizes = [1, 8, 32], strides = [1, 1, 1]} : vector<1x12x32xbf16> to vector<1x8x32xbf16>
    %29 = vector.extract_strided_slice %25 {offsets = [0, 3, 0], sizes = [1, 8, 32], strides = [1, 1, 1]} : vector<1x12x32xbf16> to vector<1x8x32xbf16>
    %30 = vector.extract_strided_slice %25 {offsets = [0, 4, 0], sizes = [1, 8, 32], strides = [1, 1, 1]} : vector<1x12x32xbf16> to vector<1x8x32xbf16>
    %31 = tpu.concatenate %26, %27, %28, %29, %30 in 2 : vector<1x8x32xbf16>, vector<1x8x32xbf16>, vector<1x8x32xbf16>, vector<1x8x32xbf16>, vector<1x8x32xbf16> -> vector<1x8x160xbf16>
    %32 = vector.shape_cast %31 : vector<1x8x160xbf16> to vector<8x160xbf16>
    %c0_9 = arith.constant 0 : index
    %c0_10 = arith.constant 0 : index
    %33 = vector.load %arg4[%c0_9, %c0_10] : memref<160x64xbf16, #tpu.memory_space<vmem>>, vector<160x64xbf16>
    %cst_11 = arith.constant dense<0.000000e+00> : vector<8x64xf32>
    %34 = tpu.matmul %32, %33, %cst_11 {dimension_numbers = #tpu.dot_dimension_numbers<[1], [0], [0], [1], [0, 0, 1, 1], [], []>} : vector<8x160xbf16>, vector<160x64xbf16>, vector<8x64xf32> -> vector<8x64xf32>
    %c0_12 = arith.constant 0 : index
    %c0_13 = arith.constant 0 : index
    %35 = vector.load %arg5[%c0_12, %c0_13] : memref<1x64xf32, #tpu.memory_space<vmem>>, vector<1x64xf32>
    %36 = vector.broadcast %35 : vector<1x64xf32> to vector<8x64xf32>
    %37 = arith.addf %34, %36 : vector<8x64xf32>
    %cst_14 = arith.constant 0.000000e+00 : f32
    %38 = vector.broadcast %cst_14 : f32 to vector<8x64xf32>
    %39 = arith.maximumf %37, %38 : vector<8x64xf32>
    %40 = vector.broadcast %cst_14 : f32 to vector<8x64xf32>
    %41 = arith.subf %37, %40 : vector<8x64xf32>
    %42 = arith.cmpf one, %41, %41 : vector<8x64xf32>
    %43 = vector.broadcast %cst_14 : f32 to vector<8x64xf32>
    %44 = arith.addf %37, %43 : vector<8x64xf32>
    %45 = math.absf %41 : vector<8x64xf32>
    %cst_15 = arith.constant 0.000000e+00 : f32
    %46 = vector.broadcast %cst_15 : f32 to vector<8x64xf32>
    %47 = arith.subf %46, %45 : vector<8x64xf32>
    %48 = math.exp %47 : vector<8x64xf32>
    %49 = math.log1p %48 : vector<8x64xf32>
    %50 = arith.addf %39, %49 : vector<8x64xf32>
    %51 = arith.select %42, %44, %50 : vector<8x64xi1>, vector<8x64xf32>
    %52 = arith.truncf %51 : vector<8x64xf32> to vector<8x64xbf16>
    %c0_16 = arith.constant 0 : index
    %c0_17 = arith.constant 0 : index
    %53 = vector.load %arg6[%c0_16, %c0_17] : memref<64x32xbf16, #tpu.memory_space<vmem>>, vector<64x32xbf16>
    %cst_18 = arith.constant dense<0.000000e+00> : vector<8x32xf32>
    %54 = tpu.matmul %52, %53, %cst_18 {dimension_numbers = #tpu.dot_dimension_numbers<[1], [0], [0], [1], [0, 0, 1, 1], [], []>} : vector<8x64xbf16>, vector<64x32xbf16>, vector<8x32xf32> -> vector<8x32xf32>
    %c0_19 = arith.constant 0 : index
    %c0_20 = arith.constant 0 : index
    %55 = vector.load %arg7[%c0_19, %c0_20] : memref<1x32xf32, #tpu.memory_space<vmem>>, vector<1x32xf32>
    %56 = vector.broadcast %55 : vector<1x32xf32> to vector<8x32xf32>
    %57 = arith.addf %54, %56 : vector<8x32xf32>
    %cst_21 = arith.constant 0.000000e+00 : f32
    %58 = vector.broadcast %cst_21 : f32 to vector<8x32xf32>
    %59 = arith.maximumf %57, %58 : vector<8x32xf32>
    %60 = vector.broadcast %cst_21 : f32 to vector<8x32xf32>
    %61 = arith.subf %57, %60 : vector<8x32xf32>
    %62 = arith.cmpf one, %61, %61 : vector<8x32xf32>
    %63 = vector.broadcast %cst_21 : f32 to vector<8x32xf32>
    %64 = arith.addf %57, %63 : vector<8x32xf32>
    %65 = math.absf %61 : vector<8x32xf32>
    %cst_22 = arith.constant 0.000000e+00 : f32
    %66 = vector.broadcast %cst_22 : f32 to vector<8x32xf32>
    %67 = arith.subf %66, %65 : vector<8x32xf32>
    %68 = math.exp %67 : vector<8x32xf32>
    %69 = math.log1p %68 : vector<8x32xf32>
    %70 = arith.addf %59, %69 : vector<8x32xf32>
    %71 = arith.select %62, %64, %70 : vector<8x32xi1>, vector<8x32xf32>
    %72 = arith.addf %1, %71 : vector<8x32xf32>
    %73 = arith.truncf %72 : vector<8x32xf32> to vector<8x32xbf16>
    %c0_23 = arith.constant 0 : index
    %c0_24 = arith.constant 0 : index
    %74 = vector.load %arg10[%c0_23, %c0_24] : memref<32x32xbf16, #tpu.memory_space<vmem>>, vector<32x32xbf16>
    %cst_25 = arith.constant dense<0.000000e+00> : vector<8x32xf32>
    %75 = tpu.matmul %73, %74, %cst_25 {dimension_numbers = #tpu.dot_dimension_numbers<[1], [0], [0], [1], [0, 0, 1, 1], [], []>} : vector<8x32xbf16>, vector<32x32xbf16>, vector<8x32xf32> -> vector<8x32xf32>
    %c0_26 = arith.constant 0 : index
    %c0_27 = arith.constant 0 : index
    %76 = vector.load %arg11[%c0_26, %c0_27] : memref<1x32xf32, #tpu.memory_space<vmem>>, vector<1x32xf32>
    %77 = vector.broadcast %76 : vector<1x32xf32> to vector<8x32xf32>
    %78 = arith.addf %75, %77 : vector<8x32xf32>
    %cst_28 = arith.constant dense<0.000000e+00> : vector<8xf32>
    %79 = vector.multi_reduction <add>, %78, %cst_28 [1] : vector<8x32xf32> to vector<8xf32>
    %80 = vector.shape_cast %79 : vector<8xf32> to vector<8x1xf32>
    %81 = arith.mulf %78, %78 : vector<8x32xf32>
    %cst_29 = arith.constant dense<0.000000e+00> : vector<8xf32>
    %82 = vector.multi_reduction <add>, %81, %cst_29 [1] : vector<8x32xf32> to vector<8xf32>
    %83 = vector.shape_cast %82 : vector<8xf32> to vector<8x1xf32>
    %cst_30 = arith.constant 3.125000e-02 : f32
    %84 = vector.broadcast %cst_30 : f32 to vector<8x1xf32>
    %85 = arith.mulf %80, %84 : vector<8x1xf32>
    %86 = arith.mulf %80, %85 : vector<8x1xf32>
    %87 = arith.subf %83, %86 : vector<8x1xf32>
    %cst_31 = arith.constant 0.000000e+00 : f32
    %88 = vector.broadcast %cst_31 : f32 to vector<8x1xf32>
    %89 = arith.maximumf %87, %88 : vector<8x1xf32>
    %cst_32 = arith.constant 0.0322580636 : f32
    %90 = vector.broadcast %cst_32 : f32 to vector<8x1xf32>
    %91 = arith.mulf %89, %90 : vector<8x1xf32>
    %92 = math.sqrt %91 : vector<8x1xf32>
    %cst_33 = arith.constant 9.99999997E-7 : f32
    %93 = vector.broadcast %cst_33 : f32 to vector<8x1xf32>
    %94 = arith.addf %92, %93 : vector<8x1xf32>
    %95 = tpu.reciprocal %94 {approx = true} : vector<8x1xf32> -> vector<8x1xf32>
    %c0_34 = arith.constant 0 : index
    %c0_35 = arith.constant 0 : index
    %96 = vector.load %arg12[%c0_34, %c0_35] : memref<1x32xf32, #tpu.memory_space<vmem>>, vector<1x32xf32>
    %97 = vector.broadcast %85 : vector<8x1xf32> to vector<8x32xf32>
    %98 = arith.subf %78, %97 : vector<8x32xf32>
    %99 = vector.broadcast %96 : vector<1x32xf32> to vector<8x32xf32>
    %100 = arith.mulf %99, %98 : vector<8x32xf32>
    %101 = vector.broadcast %95 : vector<8x1xf32> to vector<8x32xf32>
    %102 = arith.mulf %100, %101 : vector<8x32xf32>
    %c0_36 = arith.constant 0 : index
    %c0_37 = arith.constant 0 : index
    %103 = vector.load %arg13[%c0_36, %c0_37] : memref<1x32xf32, #tpu.memory_space<vmem>>, vector<1x32xf32>
    %104 = vector.broadcast %103 : vector<1x32xf32> to vector<8x32xf32>
    %105 = arith.addf %102, %104 : vector<8x32xf32>
    %106 = vector.shape_cast %105 : vector<8x32xf32> to vector<1x8x32xf32>
    %c0_38 = arith.constant 0 : index
    %c0_39 = arith.constant 0 : index
    %c0_40 = arith.constant 0 : index
    %107 = vector.load %arg14[%c0_38, %c0_39, %c0_40] : memref<1x8x32xf32, #tpu.memory_space<vmem>>, vector<1x8x32xf32>
    tpu.vector_store %arg14[%c0_38, %c0_39, %c0_40], %106 {strides = array<i32>} : memref<1x8x32xf32, #tpu.memory_space<vmem>>, vector<1x8x32xf32>,
    return
  }
  func.func @transform_0(%arg0: i32) -> (i32, i32, i32) {
    %c0_i32 = arith.constant 0 : i32
    %c0_i32_0 = arith.constant 0 : i32
    %c0_i32_1 = arith.constant 0 : i32
    return %arg0, %c0_i32, %c0_i32_0 : i32, i32, i32
  }
  func.func @transform_1(%arg0: i32) -> (i32, i32) {
    %c0_i32 = arith.constant 0 : i32
    %c0_i32_0 = arith.constant 0 : i32
    %c0_i32_1 = arith.constant 0 : i32
    return %c0_i32, %c0_i32_0 : i32, i32
  }
  func.func @transform_2(%arg0: i32) -> (i32, i32) {
    %c0_i32 = arith.constant 0 : i32
    %c0_i32_0 = arith.constant 0 : i32
    %c0_i32_1 = arith.constant 0 : i32
    return %c0_i32, %c0_i32_0 : i32, i32
  }
  func.func @transform_3(%arg0: i32) -> (i32, i32) {
    %c0_i32 = arith.constant 0 : i32
    %c0_i32_0 = arith.constant 0 : i32
    %c0_i32_1 = arith.constant 0 : i32
    return %c0_i32, %c0_i32_0 : i32, i32
  }
  func.func @transform_4(%arg0: i32) -> (i32, i32) {
    %c0_i32 = arith.constant 0 : i32
    %c0_i32_0 = arith.constant 0 : i32
    %c0_i32_1 = arith.constant 0 : i32
    return %c0_i32, %c0_i32_0 : i32, i32
  }
  func.func @transform_5(%arg0: i32) -> (i32, i32) {
    %c0_i32 = arith.constant 0 : i32
    %c0_i32_0 = arith.constant 0 : i32
    %c0_i32_1 = arith.constant 0 : i32
    return %c0_i32, %c0_i32_0 : i32, i32
  }
  func.func @transform_6(%arg0: i32) -> (i32, i32) {
    %c0_i32 = arith.constant 0 : i32
    %c0_i32_0 = arith.constant 0 : i32
    %c0_i32_1 = arith.constant 0 : i32
    return %c0_i32, %c0_i32_0 : i32, i32
  }
  func.func @transform_7(%arg0: i32) -> (i32, i32) {
    %c0_i32 = arith.constant 0 : i32
    %c0_i32_0 = arith.constant 0 : i32
    %c0_i32_1 = arith.constant 0 : i32
    return %c0_i32, %c0_i32_0 : i32, i32
  }
  func.func @transform_8(%arg0: i32) -> (i32, i32) {
    %c0_i32 = arith.constant 0 : i32
    %c0_i32_0 = arith.constant 0 : i32
    %c0_i32_1 = arith.constant 0 : i32
    return %c0_i32, %c0_i32_0 : i32, i32
  }
  func.func @transform_9(%arg0: i32) -> (i32, i32) {
    %c0_i32 = arith.constant 0 : i32
    %c0_i32_0 = arith.constant 0 : i32
    %c0_i32_1 = arith.constant 0 : i32
    return %c0_i32, %c0_i32_0 : i32, i32
  }
  func.func @transform_10(%arg0: i32) -> (i32, i32) {
    %c0_i32 = arith.constant 0 : i32
    %c0_i32_0 = arith.constant 0 : i32
    %c0_i32_1 = arith.constant 0 : i32
    return %c0_i32, %c0_i32_0 : i32, i32
  }
  func.func @transform_11(%arg0: i32) -> (i32, i32) {
    %c0_i32 = arith.constant 0 : i32
    %c0_i32_0 = arith.constant 0 : i32
    %c0_i32_1 = arith.constant 0 : i32
    return %c0_i32, %c0_i32_0 : i32, i32
  }
  func.func @transform_12(%arg0: i32) -> (i32, i32) {
    %c0_i32 = arith.constant 0 : i32
    %c0_i32_0 = arith.constant 0 : i32
    %c0_i32_1 = arith.constant 0 : i32
    return %c0_i32, %c0_i32_0 : i32, i32
  }
  func.func @transform_13(%arg0: i32) -> (i32, i32, i32) {
    %c0_i32 = arith.constant 0 : i32
    %c0_i32_0 = arith.constant 0 : i32
    %c0_i32_1 = arith.constant 0 : i32
    return %arg0, %c0_i32, %c0_i32_0 : i32, i32, i32
  }
}

</mosaic_0001>

<llo_original>
// kernel: tpu_custom_call.1
$region0: #{tpu_custom_call.1}
  #allocation0 [shape = 'u32[]', space=smem, size = 0x4, offset = 0x4, fixed_abs, tag = 'smem constant byte address 0x4 - core index']
  #allocation1 [shape = 'u32[144,128]{1,0:T(1,128)}', space=vmem, size = 0x12000, scoped, tag = 'internal scratch']
  %s0 = inlined_call_operand.vmem [shape: f32[2,8,32], index: 0, kind: input, shape index: {}]
  %s1 = inlined_call_operand.vmem [shape: bf16[32,32], index: 1, kind: input, shape index: {}]
  %s2 = inlined_call_operand.vmem [shape: f32[1,32], index: 2, kind: input, shape index: {}]
  %s3 = inlined_call_operand.vmem [shape: bf16[160,64], index: 3, kind: input, shape index: {}]
  %s4 = inlined_call_operand.vmem [shape: f32[1,64], index: 4, kind: input, shape index: {}]
  %s5 = inlined_call_operand.vmem [shape: bf16[64,32], index: 5, kind: input, shape index: {}]
  %s6 = inlined_call_operand.vmem [shape: f32[1,32], index: 6, kind: input, shape index: {}]
  %s7 = inlined_call_operand.vmem [shape: bf16[32,32], index: 7, kind: input, shape index: {}]
  %s8 = inlined_call_operand.vmem [shape: f32[1,32], index: 8, kind: input, shape index: {}]
  %s9 = inlined_call_operand.vmem [shape: bf16[32,32], index: 9, kind: input, shape index: {}]
  %s10 = inlined_call_operand.vmem [shape: f32[1,32], index: 10, kind: input, shape index: {}]
  %s11 = inlined_call_operand.vmem [shape: f32[1,32], index: 11, kind: input, shape index: {}]
  %s12 = inlined_call_operand.vmem [shape: f32[1,32], index: 12, kind: input, shape index: {}]
  %s13 = inlined_call_operand.hbm [shape: f32[2,8,32], index: 13, kind: output, shape index: {}]
  %s14 = sld [smem:[#allocation0]]
  $region85: #{tpu_custom_call.1} parent=0
    _
  %s16 = ssub.s32 1, %s14
  %s17 = scalar_select 0, %s16, %s14
  $region1: #{tpu_custom_call.1} parent=0
    #allocation2 [shape = 'u8[8192]{0}', space=vmem, size = 0x2000, scoped, tag = 'output window, operand 0']
    #allocation3 [shape = 's32[2]{0}', space=sflag, size = 0x8, scoped, tag = 'scoped memory for tpu_custom_call.1']
    %18 = vsyncpa [#allocation3], 0
    %s19 = scalar_lea.sflag [#allocation3], 1
    %20 = vsyncpa %s19, 0
    loop: start=0, step=1, limit=4
    $region2: #{tpu_custom_call.1} parent=1 // loop_pre_header
      _
    $region3: #{tpu_custom_call.1} parent=1 // loop_header
      %s22 = sphi 0, %s26
      %p23 = scmp.ge.s32.totalorder %s22, 4
      %s32 = sphi 0, %s34
      %s35 = sphi 0, %s32
      %s36 = sphi 0, %s35
      %s52 = sphi 0, %s36
      %s56 = sphi 0, %s56
      %s58 = sphi 0, %s56
      %s59 = sphi 0, %s58
      %s73 = sphi 0, %s59
      %s77 = sphi 0, %s77
      %s79 = sphi 0, %s77
      %s80 = sphi 0, %s79
      %s94 = sphi 0, %s80
      %s98 = sphi 0, %s98
      %s100 = sphi 0, %s98
      %s101 = sphi 0, %s100
      %s115 = sphi 0, %s101
      %s119 = sphi 0, %s119
      %s121 = sphi 0, %s119
      %s122 = sphi 0, %s121
      %s136 = sphi 0, %s122
      %s140 = sphi 0, %s140
      %s142 = sphi 0, %s140
      %s143 = sphi 0, %s142
      %s157 = sphi 0, %s143
      %s161 = sphi 0, %s161
      %s163 = sphi 0, %s161
      %s164 = sphi 0, %s163
      %s178 = sphi 0, %s164
      %s182 = sphi 0, %s182
      %s184 = sphi 0, %s182
      %s185 = sphi 0, %s184
      %s199 = sphi 0, %s185
      %s203 = sphi 0, %s203
      %s205 = sphi 0, %s203
      %s206 = sphi 0, %s205
      %s220 = sphi 0, %s206
      %s224 = sphi 0, %s224
      %s226 = sphi 0, %s224
      %s227 = sphi 0, %s226
      %s241 = sphi 0, %s227
      %s245 = sphi 0, %s245
      %s247 = sphi 0, %s245
      %s248 = sphi 0, %s247
      %s262 = sphi 0, %s248
      %s266 = sphi 0, %s266
      %s268 = sphi 0, %s266
      %s269 = sphi 0, %s268
      %s283 = sphi 0, %s269
      %s287 = sphi 0, %s287
      %s289 = sphi 0, %s287
      %s290 = sphi 0, %s289
      %s304 = sphi 0, %s290
      %s310 = sphi 0, %s312
      %s313 = sphi 0, %s310
      %s314 = sphi 0, %s313
      %s330 = sphi 0, %s314
    $region4: #{tpu_custom_call.1} parent=1 // loop_header_branch
      %25 = sbr.rel (%p23) target = $region8
    $region5: #{tpu_custom_call.1} parent=1 // loop_body
      %s27 = ssub.s32 %s22, 1
      %s28 = ssub.s32 %s22, 2
      %s29 = sadd.s32 %s22, 1
      %s30 = ssub.s32 %s22, %s29
      %p31 = scmp.eq.s32.totalorder %s30, 0
      %s33 = sadd.s32 %s32, 1
      %s34 = scalar_select %p31, %s32, %s33
      %p37 = pneg %p31
      %p38 = scmp.eq.s32.totalorder %s22, 1
      %p39 = por %p37, %p38
      %p40 = scmp.ne.s32.totalorder %s32, %s35
      %p41 = scmp.eq.s32.totalorder %s22, 0
      %p42 = por %p40, %p41
      %p43 = scmp.ne.s32.totalorder %s32, %s35
      %p44 = scmp.eq.s32.totalorder %s27, 1
      %p45 = por %p43, %p44
      %p46 = scmp.ne.s32.totalorder %s35, %s36
      %p47 = scmp.eq.s32.totalorder %s27, 0
      %p48 = por %p46, %p47
      %p49 = scmp.ne.s32.totalorder %s35, %s36
      %p50 = scmp.eq.s32.totalorder %s28, 1
      %p51 = por %p49, %p50
      %p53 = scmp.ne.s32.totalorder %s36, %s52
      %p54 = scmp.eq.s32.totalorder %s28, 0
      %p55 = por %p53, %p54
      %s57 = sadd.s32 %s56, 1
      %p60 = scmp.eq.s32.totalorder %s22, 1
      %p61 = scmp.ne.s32.totalorder %s56, %s58
      %p62 = scmp.eq.s32.totalorder %s22, 0
      %p63 = por %p61, %p62
      %p64 = scmp.ne.s32.totalorder %s56, %s58
      %p65 = scmp.eq.s32.totalorder %s27, 1
      %p66 = por %p64, %p65
      %p67 = scmp.ne.s32.totalorder %s58, %s59
      %p68 = scmp.eq.s32.totalorder %s27, 0
      %p69 = por %p67, %p68
      %p70 = scmp.ne.s32.totalorder %s58, %s59
      %p71 = scmp.eq.s32.totalorder %s28, 1
      %p72 = por %p70, %p71
      %p74 = scmp.ne.s32.totalorder %s59, %s73
      %p75 = scmp.eq.s32.totalorder %s28, 0
      %p76 = por %p74, %p75
      %s78 = sadd.s32 %s77, 1
      %p81 = scmp.eq.s32.totalorder %s22, 1
      %p82 = scmp.ne.s32.totalorder %s77, %s79
      %p83 = scmp.eq.s32.totalorder %s22, 0
      %p84 = por %p82, %p83
      %p85 = scmp.ne.s32.totalorder %s77, %s79
      %p86 = scmp.eq.s32.totalorder %s27, 1
      %p87 = por %p85, %p86
      %p88 = scmp.ne.s32.totalorder %s79, %s80
      %p89 = scmp.eq.s32.totalorder %s27, 0
      %p90 = por %p88, %p89
      %p91 = scmp.ne.s32.totalorder %s79, %s80
      %p92 = scmp.eq.s32.totalorder %s28, 1
      %p93 = por %p91, %p92
      %p95 = scmp.ne.s32.totalorder %s80, %s94
      %p96 = scmp.eq.s32.totalorder %s28, 0
      %p97 = por %p95, %p96
      %s99 = sadd.s32 %s98, 1
      %p102 = scmp.eq.s32.totalorder %s22, 1
      %p103 = scmp.ne.s32.totalorder %s98, %s100
      %p104 = scmp.eq.s32.totalorder %s22, 0
      %p105 = por %p103, %p104
      %p106 = scmp.ne.s32.totalorder %s98, %s100
      %p107 = scmp.eq.s32.totalorder %s27, 1
      %p108 = por %p106, %p107
      %p109 = scmp.ne.s32.totalorder %s100, %s101
      %p110 = scmp.eq.s32.totalorder %s27, 0
      %p111 = por %p109, %p110
      %p112 = scmp.ne.s32.totalorder %s100, %s101
      %p113 = scmp.eq.s32.totalorder %s28, 1
      %p114 = por %p112, %p113
      %p116 = scmp.ne.s32.totalorder %s101, %s115
      %p117 = scmp.eq.s32.totalorder %s28, 0
      %p118 = por %p116, %p117
      %s120 = sadd.s32 %s119, 1
      %p123 = scmp.eq.s32.totalorder %s22, 1
      %p124 = scmp.ne.s32.totalorder %s119, %s121
      %p125 = scmp.eq.s32.totalorder %s22, 0
      %p126 = por %p124, %p125
      %p127 = scmp.ne.s32.totalorder %s119, %s121
      %p128 = scmp.eq.s32.totalorder %s27, 1
      %p129 = por %p127, %p128
      %p130 = scmp.ne.s32.totalorder %s121, %s122
      %p131 = scmp.eq.s32.totalorder %s27, 0
      %p132 = por %p130, %p131
      %p133 = scmp.ne.s32.totalorder %s121, %s122
      %p134 = scmp.eq.s32.totalorder %s28, 1
      %p135 = por %p133, %p134
      %p137 = scmp.ne.s32.totalorder %s122, %s136
      %p138 = scmp.eq.s32.totalorder %s28, 0
      %p139 = por %p137, %p138
      %s141 = sadd.s32 %s140, 1
      %p144 = scmp.eq.s32.totalorder %s22, 1
      %p145 = scmp.ne.s32.totalorder %s140, %s142
      %p146 = scmp.eq.s32.totalorder %s22, 0
      %p147 = por %p145, %p146
      %p148 = scmp.ne.s32.totalorder %s140, %s142
      %p149 = scmp.eq.s32.totalorder %s27, 1
      %p150 = por %p148, %p149
      %p151 = scmp.ne.s32.totalorder %s142, %s143
      %p152 = scmp.eq.s32.totalorder %s27, 0
      %p153 = por %p151, %p152
      %p154 = scmp.ne.s32.totalorder %s142, %s143
      %p155 = scmp.eq.s32.totalorder %s28, 1
      %p156 = por %p154, %p155
      %p158 = scmp.ne.s32.totalorder %s143, %s157
      %p159 = scmp.eq.s32.totalorder %s28, 0
      %p160 = por %p158, %p159
      %s162 = sadd.s32 %s161, 1
      %p165 = scmp.eq.s32.totalorder %s22, 1
      %p166 = scmp.ne.s32.totalorder %s161, %s163
      %p167 = scmp.eq.s32.totalorder %s22, 0
      %p168 = por %p166, %p167
      %p169 = scmp.ne.s32.totalorder %s161, %s163
      %p170 = scmp.eq.s32.totalorder %s27, 1
      %p171 = por %p169, %p170
      %p172 = scmp.ne.s32.totalorder %s163, %s164
      %p173 = scmp.eq.s32.totalorder %s27, 0
      %p174 = por %p172, %p173
      %p175 = scmp.ne.s32.totalorder %s163, %s164
      %p176 = scmp.eq.s32.totalorder %s28, 1
      %p177 = por %p175, %p176
      %p179 = scmp.ne.s32.totalorder %s164, %s178
      %p180 = scmp.eq.s32.totalorder %s28, 0
      %p181 = por %p179, %p180
      %s183 = sadd.s32 %s182, 1
      %p186 = scmp.eq.s32.totalorder %s22, 1
      %p187 = scmp.ne.s32.totalorder %s182, %s184
      %p188 = scmp.eq.s32.totalorder %s22, 0
      %p189 = por %p187, %p188
      %p190 = scmp.ne.s32.totalorder %s182, %s184
      %p191 = scmp.eq.s32.totalorder %s27, 1
      %p192 = por %p190, %p191
      %p193 = scmp.ne.s32.totalorder %s184, %s185
      %p194 = scmp.eq.s32.totalorder %s27, 0
      %p195 = por %p193, %p194
      %p196 = scmp.ne.s32.totalorder %s184, %s185
      %p197 = scmp.eq.s32.totalorder %s28, 1
      %p198 = por %p196, %p197
      %p200 = scmp.ne.s32.totalorder %s185, %s199
      %p201 = scmp.eq.s32.totalorder %s28, 0
      %p202 = por %p200, %p201
      %s204 = sadd.s32 %s203, 1
      %p207 = scmp.eq.s32.totalorder %s22, 1
      %p208 = scmp.ne.s32.totalorder %s203, %s205
      %p209 = scmp.eq.s32.totalorder %s22, 0
      %p210 = por %p208, %p209
      %p211 = scmp.ne.s32.totalorder %s203, %s205
      %p212 = scmp.eq.s32.totalorder %s27, 1
      %p213 = por %p211, %p212
      %p214 = scmp.ne.s32.totalorder %s205, %s206
      %p215 = scmp.eq.s32.totalorder %s27, 0
      %p216 = por %p214, %p215
      %p217 = scmp.ne.s32.totalorder %s205, %s206
      %p218 = scmp.eq.s32.totalorder %s28, 1
      %p219 = por %p217, %p218
      %p221 = scmp.ne.s32.totalorder %s206, %s220
      %p222 = scmp.eq.s32.totalorder %s28, 0
      %p223 = por %p221, %p222
      %s225 = sadd.s32 %s224, 1
      %p228 = scmp.eq.s32.totalorder %s22, 1
      %p229 = scmp.ne.s32.totalorder %s224, %s226
      %p230 = scmp.eq.s32.totalorder %s22, 0
      %p231 = por %p229, %p230
      %p232 = scmp.ne.s32.totalorder %s224, %s226
      %p233 = scmp.eq.s32.totalorder %s27, 1
      %p234 = por %p232, %p233
      %p235 = scmp.ne.s32.totalorder %s226, %s227
      %p236 = scmp.eq.s32.totalorder %s27, 0
      %p237 = por %p235, %p236
      %p238 = scmp.ne.s32.totalorder %s226, %s227
      %p239 = scmp.eq.s32.totalorder %s28, 1
      %p240 = por %p238, %p239
      %p242 = scmp.ne.s32.totalorder %s227, %s241
      %p243 = scmp.eq.s32.totalorder %s28, 0
      %p244 = por %p242, %p243
      %s246 = sadd.s32 %s245, 1
      %p249 = scmp.eq.s32.totalorder %s22, 1
      %p250 = scmp.ne.s32.totalorder %s245, %s247
      %p251 = scmp.eq.s32.totalorder %s22, 0
      %p252 = por %p250, %p251
      %p253 = scmp.ne.s32.totalorder %s245, %s247
      %p254 = scmp.eq.s32.totalorder %s27, 1
      %p255 = por %p253, %p254
      %p256 = scmp.ne.s32.totalorder %s247, %s248
      %p257 = scmp.eq.s32.totalorder %s27, 0
      %p258 = por %p256, %p257
      %p259 = scmp.ne.s32.totalorder %s247, %s248
      %p260 = scmp.eq.s32.totalorder %s28, 1
      %p261 = por %p259, %p260
      %p263 = scmp.ne.s32.totalorder %s248, %s262
      %p264 = scmp.eq.s32.totalorder %s28, 0
      %p265 = por %p263, %p264
      %s267 = sadd.s32 %s266, 1
      %p270 = scmp.eq.s32.totalorder %s22, 1
      %p271 = scmp.ne.s32.totalorder %s266, %s268
      %p272 = scmp.eq.s32.totalorder %s22, 0
      %p273 = por %p271, %p272
      %p274 = scmp.ne.s32.totalorder %s266, %s268
      %p275 = scmp.eq.s32.totalorder %s27, 1
      %p276 = por %p274, %p275
      %p277 = scmp.ne.s32.totalorder %s268, %s269
      %p278 = scmp.eq.s32.totalorder %s27, 0
      %p279 = por %p277, %p278
      %p280 = scmp.ne.s32.totalorder %s268, %s269
      %p281 = scmp.eq.s32.totalorder %s28, 1
      %p282 = por %p280, %p281
      %p284 = scmp.ne.s32.totalorder %s269, %s283
      %p285 = scmp.eq.s32.totalorder %s28, 0
      %p286 = por %p284, %p285
      %s288 = sadd.s32 %s287, 1
      %p291 = scmp.eq.s32.totalorder %s22, 1
      %p292 = scmp.ne.s32.totalorder %s287, %s289
      %p293 = scmp.eq.s32.totalorder %s22, 0
      %p294 = por %p292, %p293
      %p295 = scmp.ne.s32.totalorder %s287, %s289
      %p296 = scmp.eq.s32.totalorder %s27, 1
      %p297 = por %p295, %p296
      %p298 = scmp.ne.s32.totalorder %s289, %s290
      %p299 = scmp.eq.s32.totalorder %s27, 0
      %p300 = por %p298, %p299
      %p301 = scmp.ne.s32.totalorder %s289, %s290
      %p302 = scmp.eq.s32.totalorder %s28, 1
      %p303 = por %p301, %p302
      %p305 = scmp.ne.s32.totalorder %s290, %s304
      %p306 = scmp.eq.s32.totalorder %s28, 0
      %p307 = por %p305, %p306
      %s308 = ssub.s32 %s22, %s29
      %p309 = scmp.eq.s32.totalorder %s308, 0
      %s311 = sadd.s32 %s310, 1
      %s312 = scalar_select %p309, %s310, %s311
      %p315 = pneg %p309
      %p316 = scmp.eq.s32.totalorder %s22, 1
      %p317 = por %p315, %p316
      %p318 = scmp.ne.s32.totalorder %s310, %s313
      %p319 = scmp.eq.s32.totalorder %s22, 0
      %p320 = por %p318, %p319
      %p321 = scmp.ne.s32.totalorder %s310, %s313
      %p322 = scmp.eq.s32.totalorder %s27, 1
      %p323 = por %p321, %p322
      %p324 = scmp.ne.s32.totalorder %s313, %s314
      %p325 = scmp.eq.s32.totalorder %s27, 0
      %p326 = por %p324, %p325
      %p327 = scmp.ne.s32.totalorder %s313, %s314
      %p328 = scmp.eq.s32.totalorder %s28, 1
      %p329 = por %p327, %p328
      %p331 = scmp.ne.s32.totalorder %s314, %s330
      %p332 = scmp.eq.s32.totalorder %s28, 0
      %p333 = por %p331, %p332
      %p334 = scmp.le.s32.totalorder 1, %s22
      %p335 = scmp.lt.s32.totalorder %s22, 3
      %p336 = pnand %p334, %p335
      %p337 = pneg %p336
      // Predicated region
      $region9: #{tpu_custom_call.1} parent=5 // pred_check
        _
      $region10: #{tpu_custom_call.1} parent=5 // pred_check_branch
        %339 = sbr.rel (%p336) target = $region12
      $region11: #{tpu_custom_call.1} parent=5 // pred_region
        %s340 = ssub.s32 %s22, 1
        // Predicated region
        $region13: #{tpu_custom_call.1} parent=11 // pred_check
          %p341 = pneg %p69
        $region14: #{tpu_custom_call.1} parent=11 // pred_check_branch
          %343 = sbr.rel (%p341) target = $region16
        $region15: #{tpu_custom_call.1} parent=11 // pred_region
          _
        $region16: #{tpu_custom_call.1} parent=11 // pred_fallthru
          _
        // Predicated region
        $region17: #{tpu_custom_call.1} parent=11 // pred_check
          %p344 = pneg %p90
        $region18: #{tpu_custom_call.1} parent=11 // pred_check_branch
          %346 = sbr.rel (%p344) target = $region20
        $region19: #{tpu_custom_call.1} parent=11 // pred_region
          _
        $region20: #{tpu_custom_call.1} parent=11 // pred_fallthru
          _
        // Predicated region
        $region21: #{tpu_custom_call.1} parent=11 // pred_check
          %p347 = pneg %p111
        $region22: #{tpu_custom_call.1} parent=11 // pred_check_branch
          %349 = sbr.rel (%p347) target = $region24
        $region23: #{tpu_custom_call.1} parent=11 // pred_region
          _
        $region24: #{tpu_custom_call.1} parent=11 // pred_fallthru
          _
        // Predicated region
        $region25: #{tpu_custom_call.1} parent=11 // pred_check
          %p350 = pneg %p132
        $region26: #{tpu_custom_call.1} parent=11 // pred_check_branch
          %352 = sbr.rel (%p350) target = $region28
        $region27: #{tpu_custom_call.1} parent=11 // pred_region
          _
        $region28: #{tpu_custom_call.1} parent=11 // pred_fallthru
          _
        // Predicated region
        $region29: #{tpu_custom_call.1} parent=11 // pred_check
          %p353 = pneg %p153
        $region30: #{tpu_custom_call.1} parent=11 // pred_check_branch
          %355 = sbr.rel (%p353) target = $region32
        $region31: #{tpu_custom_call.1} parent=11 // pred_region
          _
        $region32: #{tpu_custom_call.1} parent=11 // pred_fallthru
          _
        // Predicated region
        $region33: #{tpu_custom_call.1} parent=11 // pred_check
          %p356 = pneg %p174
        $region34: #{tpu_custom_call.1} parent=11 // pred_check_branch
          %358 = sbr.rel (%p356) target = $region36
        $region35: #{tpu_custom_call.1} parent=11 // pred_region
          _
        $region36: #{tpu_custom_call.1} parent=11 // pred_fallthru
          _
        // Predicated region
        $region37: #{tpu_custom_call.1} parent=11 // pred_check
          %p359 = pneg %p195
        $region38: #{tpu_custom_call.1} parent=11 // pred_check_branch
          %361 = sbr.rel (%p359) target = $region40
        $region39: #{tpu_custom_call.1} parent=11 // pred_region
          _
        $region40: #{tpu_custom_call.1} parent=11 // pred_fallthru
          _
        // Predicated region
        $region41: #{tpu_custom_call.1} parent=11 // pred_check
          %p362 = pneg %p216
        $region42: #{tpu_custom_call.1} parent=11 // pred_check_branch
          %364 = sbr.rel (%p362) target = $region44
        $region43: #{tpu_custom_call.1} parent=11 // pred_region
          _
        $region44: #{tpu_custom_call.1} parent=11 // pred_fallthru
          _
        // Predicated region
        $region45: #{tpu_custom_call.1} parent=11 // pred_check
          %p365 = pneg %p237
        $region46: #{tpu_custom_call.1} parent=11 // pred_check_branch
          %367 = sbr.rel (%p365) target = $region48
        $region47: #{tpu_custom_call.1} parent=11 // pred_region
          _
        $region48: #{tpu_custom_call.1} parent=11 // pred_fallthru
          _
        // Predicated region
        $region49: #{tpu_custom_call.1} parent=11 // pred_check
          %p368 = pneg %p258
        $region50: #{tpu_custom_call.1} parent=11 // pred_check_branch
          %370 = sbr.rel (%p368) target = $region52
        $region51: #{tpu_custom_call.1} parent=11 // pred_region
          _
        $region52: #{tpu_custom_call.1} parent=11 // pred_fallthru
          _
        // Predicated region
        $region53: #{tpu_custom_call.1} parent=11 // pred_check
          %p371 = pneg %p279
        $region54: #{tpu_custom_call.1} parent=11 // pred_check_branch
          %373 = sbr.rel (%p371) target = $region56
        $region55: #{tpu_custom_call.1} parent=11 // pred_region
          _
        $region56: #{tpu_custom_call.1} parent=11 // pred_fallthru
          _
        // Predicated region
        $region57: #{tpu_custom_call.1} parent=11 // pred_check
          %p374 = pneg %p300
        $region58: #{tpu_custom_call.1} parent=11 // pred_check_branch
          %376 = sbr.rel (%p374) target = $region60
        $region59: #{tpu_custom_call.1} parent=11 // pred_region
          _
        $region60: #{tpu_custom_call.1} parent=11 // pred_fallthru
          _
      $region12: #{tpu_custom_call.1} parent=5 // pred_fallthru
        _
      %p377 = scmp.lt.s32.totalorder %s22, 2
      // Predicated region
      $region61: #{tpu_custom_call.1} parent=5 // pred_check
        %p378 = pneg %p377
      $region62: #{tpu_custom_call.1} parent=5 // pred_check_branch
        %380 = sbr.rel (%p378) target = $region64
      $region63: #{tpu_custom_call.1} parent=5 // pred_region
        // Predicated region
        $region65: #{tpu_custom_call.1} parent=63 // pred_check
          %p381 = pneg %p42
        $region66: #{tpu_custom_call.1} parent=63 // pred_check_branch
          %383 = sbr.rel (%p381) target = $region68
        $region67: #{tpu_custom_call.1} parent=63 // pred_region
          %p384 = scmp.lt.s32.totalorder %s22, 1
          %s385 = scalar_select %p384, %s22, 1
          %s386 = smul.addr %s385, 8
          %s387 = scalar_lea.vmem %s0, %s386
        $region68: #{tpu_custom_call.1} parent=63 // pred_fallthru
          _
      $region64: #{tpu_custom_call.1} parent=5 // pred_fallthru
        _
      %p388 = scmp.le.s32.totalorder 1, %s22
      %p389 = scmp.lt.s32.totalorder %s22, 3
      %p390 = pnand %p388, %p389
      %p391 = pneg %p390
      // Predicated region
      $region69: #{tpu_custom_call.1} parent=5 // pred_check
        _
      $region70: #{tpu_custom_call.1} parent=5 // pred_check_branch
        %393 = sbr.rel (%p390) target = $region72
      $region71: #{tpu_custom_call.1} parent=5 // pred_region
        %s394 = ssub.s32 %s22, 1
        %p395 = scmp.lt.s32.totalorder %s27, 1
        %s396 = scalar_select %p395, %s27, 1
        %s397 = smul.addr %s396, 8
        %s398 = scalar_lea.vmem %s0, %s397
        %p399 = pneg %p48
        %p400 = pneg %p45
        %p401 = pneg %p69
        %p402 = pneg %p66
        %p403 = pneg %p90
        %p404 = pneg %p87
        %p405 = pneg %p111
        %p406 = pneg %p108
        %p407 = pneg %p132
        %p408 = pneg %p129
        %p409 = pneg %p153
        %p410 = pneg %p150
        %p411 = pneg %p174
        %p412 = pneg %p171
        %p413 = pneg %p195
        %p414 = pneg %p192
        %p415 = pneg %p216
        %p416 = pneg %p213
        %p417 = pneg %p237
        %p418 = pneg %p234
        %p419 = pneg %p258
        %p420 = pneg %p255
        %p421 = pneg %p279
        %p422 = pneg %p276
        %p423 = pneg %p300
        %p424 = pneg %p297
        %p425 = pneg %p326
        %p426 = pneg %p323
        %s427 = sand.u32 %s313, 1
        %s428 = scalar_lea.sflag [#allocation3], %s427
        %s429 = sand.u32 %s313, 1
        %s430 = smul.addr %s429, 8
        %s431 = scalar_lea.vmem [#allocation2], %s430
        %p432 = scmp.lt.s32.totalorder %s27, 1
        %s433 = scalar_select %p432, %s27, 1
        %s434 = smul.addr %s433, 8
        %s435 = scalar_lea.vmem %s0, %s434
        %v437 = vld [vmem:[%s435] sm:$0xff]
        %v438 = vpack.c.bf16 %v437, %v437
        %v439 = vld [vmem:[%s1] sm:$0xf]
        %v440 = vld [vmem:[%s1 + $0x4] sm:$0xf]
        %v441 = vld [vmem:[%s1 + $0x8] sm:$0xf]
        %v442 = vld [vmem:[%s1 + $0xc] sm:$0xf]
        %v443 = vld [vmem:[%s2] sm:$0x1]
        %v445 = vlaneseq
        %v446 = vshrl.u32 %v445, 7
        %v447 = vsub.s32 0, %v446
        %v448 = vrot.slane %v443, %v447
        %v454 = vunpack.c.l.b16 %v439
        %v455 = vunpack.c.l.b16 %v440
        %v456 = vunpack.c.l.b16 %v441
        %v457 = vunpack.c.l.b16 %v442
        %v458 = vpack.c.b16 %v455, %v454
        %v459 = vpack.c.b16 %v457, %v456
        %vm462 = vcmask 261120
        %v464 = vsel %vm462, %v438, 0
        %466 = vmatprep.subr.bf16.mxu0 0
        %467 = vmatpush1.bf16.msra.mxu0 %v458
        %468 = vmatprep.subr.bf16.mxu0 0
        %469 = vmatpush1.bf16.msra.mxu0 %v459
        %470 = vmatprep.subr.bf16.mxu0 0
        %471 = vmatpush1.bf16.msra.mxu0 0
        %472 = vmatprep.subr.bf16.mxu0 0
        %473 = vmatpush1.bf16.msra.mxu0 0
        %474 = vmatprep.subr.bf16.mxu0 0
        %475 = vmatpush1.bf16.msra.mxu0 0
        %476 = vmatprep.subr.bf16.mxu0 0
        %477 = vmatpush1.bf16.msra.mxu0 0
        %478 = vmatprep.subr.bf16.mxu0 0
        %479 = vmatpush1.bf16.msra.mxu0 0
        %480 = vmatprep.subr.bf16.mxu0 0
        %481 = vmatpush1.bf16.msra.mxu0 0
        %482 = vmatprep.subr.bf16.mxu0 0
        %483 = vmatpush1.bf16.msra.mxu0 0
        %484 = vmatprep.subr.bf16.mxu0 0
        %485 = vmatpush1.bf16.msra.mxu0 0
        %486 = vmatprep.subr.bf16.mxu0 0
        %487 = vmatpush1.bf16.msra.mxu0 0
        %488 = vmatprep.subr.bf16.mxu0 0
        %489 = vmatpush1.bf16.msra.mxu0 0
        %490 = vmatprep.subr.bf16.mxu0 0
        %491 = vmatpush1.bf16.msra.mxu0 0
        %492 = vmatprep.subr.bf16.mxu0 0
        %493 = vmatpush1.bf16.msra.mxu0 0
        %494 = vmatprep.subr.bf16.mxu0 0
        %495 = vmatpush1.bf16.msra.mxu0 0
        %496 = vmatprep.subr.bf16.mxu0 0
        %497 = vmatpush1.bf16.msra.mxu0 0
        %498 = vmatprep.mubr.bf16.mxu0 0
        %499 = vmatmul.mubr.bf16.gmra.mrb[0].mxu0 %v464
        %v500 = vpop.f32.mrb[0].mxu0
        %v501 = vadd.f32 %v448, %v500
        %v502 = vpop.f32.mrb[0].mxu0
        %v503 = vpop.f32.mrb[0].mxu0
        %v504 = vpop.f32.mrb[0].mxu0
        %505 = vdwg.mxu0
        %v506 = vmax.f32 %v501, 0.0
        %vm507 = vcmp.ne.f32.partialorder %v501, %v501
        %v508 = vadd.f32 %v501, 0.0
        %v509 = vand.u32 2147483647, %v501
        %v510 = vsub.f32 0.0, %v509
        %v511 = vmul.f32 %v510, 1.442695
        %v512 = vpow.pop %v511
        %v513 = vadd.f32 %v512, 1.0
        %v514 = vlog2.pop %v513
        %v515 = vmul.f32 %v514, 0.6931472
        %v516 = vmul.f32 -0.5, %v512
        %v517 = vadd.f32 %v516, 1.0
        %v518 = vmul.f32 %v517, %v512
        %v519 = vand.u32 2147483647, %v512
        %vm520 = vcmp.lt.f32.partialorder %v519, 0.0004427343
        %v521 = vsel %vm520, %v518, %v515
        %v522 = vadd.f32 %v506, %v521
        %v523 = vsel %vm507, %v508, %v522
        %v524 = vpack.c.bf16 %v523, %v523
        %v526 = vrot.slane %v524, 6
        %vm527 = vcmask 1041408
        %v530 = vsel %vm527, 0, %v526
        %v531 = vshrl.u32 %v530, 16
        %v533 = vshll.u32 %v530, 16
        %v535 = vrot.slane %v533, 1
        %v536 = vor.u32 %v531, %v535
        %537 = vrot.lane.b32.xlu0 %v536, 32
        %v538 = vpop.permute.xlu0 %537
        %v540 = vrot.slane %v530, 1
        %541 = vrot.lane.b32.xlu0 %v540, 64
        %v542 = vpop.permute.xlu0 %541
        %v543 = vrot.slane %v531, 1
        %v544 = vrot.slane %v533, 2
        %v545 = vor.u32 %v543, %v544
        %546 = vrot.lane.b32.xlu0 %v545, 96
        %v547 = vpop.permute.xlu0 %546
        %v548 = vrot.slane %v530, 2
        %v550 = vsel %vm462, %v530, %v538
        %vm551 = vcmask 523264
        %v553 = vsel %vm551, %v550, %v542
        %vm554 = vcmask 785408
        %v556 = vsel %vm554, %v553, %v547
        %v558 = vld [vmem:[%s3] sm:$0xf]
        %v559 = vld [vmem:[%s3 + $0x4] sm:$0xf]
        %v560 = vld [vmem:[%s3 + $0x8] sm:$0xf]
        %v561 = vld [vmem:[%s3 + $0xc] sm:$0xf]
        %v562 = vld [vmem:[%s3 + $0x10] sm:$0xf]
        %v563 = vld [vmem:[%s3 + $0x14] sm:$0xf]
        %v564 = vld [vmem:[%s3 + $0x18] sm:$0xf]
        %v565 = vld [vmem:[%s3 + $0x1c] sm:$0xf]
        %v566 = vld [vmem:[%s3 + $0x20] sm:$0xf]
        %v567 = vld [vmem:[%s3 + $0x24] sm:$0xf]
        %v568 = vld [vmem:[%s3 + $0x28] sm:$0xf]
        %v569 = vld [vmem:[%s3 + $0x2c] sm:$0xf]
        %v570 = vld [vmem:[%s3 + $0x30] sm:$0xf]
        %v571 = vld [vmem:[%s3 + $0x34] sm:$0xf]
        %v572 = vld [vmem:[%s3 + $0x38] sm:$0xf]
        %v573 = vld [vmem:[%s3 + $0x3c] sm:$0xf]
        %v574 = vld [vmem:[%s3 + $0x40] sm:$0xf]
        %v575 = vld [vmem:[%s3 + $0x44] sm:$0xf]
        %v576 = vld [vmem:[%s3 + $0x48] sm:$0xf]
        %v577 = vld [vmem:[%s3 + $0x4c] sm:$0xf]
        %v578 = vld [vmem:[%s4] sm:$0x1]
        %v580 = vlaneseq
        %v581 = vshrl.u32 %v580, 7
        %v582 = vsub.s32 0, %v581
        %v583 = vrot.slane %v578, %v582
        %v605 = vunpack.c.l.b16 %v558
        %v606 = vunpack.c.l.b16 %v559
        %v607 = vunpack.c.l.b16 %v560
        %v608 = vunpack.c.l.b16 %v561
        %v609 = vunpack.c.l.b16 %v562
        %v610 = vunpack.c.l.b16 %v563
        %v611 = vunpack.c.l.b16 %v564
        %v612 = vunpack.c.l.b16 %v565
        %v613 = vunpack.c.l.b16 %v566
        %v614 = vunpack.c.l.b16 %v567
        %v615 = vunpack.c.l.b16 %v568
        %v616 = vunpack.c.l.b16 %v569
        %v617 = vunpack.c.l.b16 %v570
        %v618 = vunpack.c.l.b16 %v571
        %v619 = vunpack.c.l.b16 %v572
        %v620 = vunpack.c.l.b16 %v573
        %v621 = vunpack.c.l.b16 %v574
        %v622 = vunpack.c.l.b16 %v575
        %v623 = vunpack.c.l.b16 %v576
        %v624 = vunpack.c.l.b16 %v577
        %v625 = vpack.c.b16 %v606, %v605
        %v626 = vpack.c.b16 %v608, %v607
        %v627 = vpack.c.b16 %v610, %v609
        %v628 = vpack.c.b16 %v612, %v611
        %v629 = vpack.c.b16 %v614, %v613
        %v630 = vpack.c.b16 %v616, %v615
        %v631 = vpack.c.b16 %v618, %v617
        %v632 = vpack.c.b16 %v620, %v619
        %v633 = vpack.c.b16 %v622, %v621
        %v634 = vpack.c.b16 %v624, %v623
        %v646 = vsel %vm462, %v548, 0
        %648 = vmatprep.subr.bf16.mxu0 0
        %649 = vmatpush1.bf16.msra.mxu0 %v625
        %650 = vmatprep.subr.bf16.mxu0 0
        %651 = vmatpush1.bf16.msra.mxu0 %v626
        %652 = vmatprep.subr.bf16.mxu0 0
        %653 = vmatpush1.bf16.msra.mxu0 %v627
        %654 = vmatprep.subr.bf16.mxu0 0
        %655 = vmatpush1.bf16.msra.mxu0 %v628
        %656 = vmatprep.subr.bf16.mxu0 0
        %657 = vmatpush1.bf16.msra.mxu0 %v629
        %658 = vmatprep.subr.bf16.mxu0 0
        %659 = vmatpush1.bf16.msra.mxu0 %v630
        %660 = vmatprep.subr.bf16.mxu0 0
        %661 = vmatpush1.bf16.msra.mxu0 %v631
        %662 = vmatprep.subr.bf16.mxu0 0
        %663 = vmatpush1.bf16.msra.mxu0 %v632
        %664 = vmatprep.subr.bf16.mxu0 0
        %665 = vmatpush1.bf16.msra.mxu0 %v633
        %666 = vmatprep.subr.bf16.mxu0 0
        %667 = vmatpush1.bf16.msra.mxu0 %v634
        %668 = vmatprep.subr.bf16.mxu0 0
        %669 = vmatpush1.bf16.msra.mxu0 0
        %670 = vmatprep.subr.bf16.mxu0 0
        %671 = vmatpush1.bf16.msra.mxu0 0
        %672 = vmatprep.subr.bf16.mxu0 0
        %673 = vmatpush1.bf16.msra.mxu0 0
        %674 = vmatprep.subr.bf16.mxu0 0
        %675 = vmatpush1.bf16.msra.mxu0 0
        %676 = vmatprep.subr.bf16.mxu0 0
        %677 = vmatpush1.bf16.msra.mxu0 0
        %678 = vmatprep.subr.bf16.mxu0 0
        %679 = vmatpush1.bf16.msra.mxu0 0
        %680 = vmatprep.mubr.bf16.mxu0 %v646
        %681 = vmatmul.mubr.bf16.gmra.mrb[0].mxu0 %v556
        %v682 = vpop.f32.mrb[0].mxu0
        %v683 = vadd.f32 %v583, %v682
        %v684 = vpop.f32.mrb[0].mxu0
        %v685 = vpop.f32.mrb[0].mxu0
        %v686 = vpop.f32.mrb[0].mxu0
        %687 = vdwg.mxu0
        %v688 = vmax.f32 %v683, 0.0
        %vm689 = vcmp.ne.f32.partialorder %v683, %v683
        %v690 = vadd.f32 %v683, 0.0
        %v691 = vand.u32 2147483647, %v683
        %v692 = vsub.f32 0.0, %v691
        %v693 = vmul.f32 %v692, 1.442695
        %v694 = vpow.pop %v693
        %v695 = vadd.f32 %v694, 1.0
        %v696 = vlog2.pop %v695
        %v697 = vmul.f32 %v696, 0.6931472
        %v698 = vmul.f32 -0.5, %v694
        %v699 = vadd.f32 %v698, 1.0
        %v700 = vmul.f32 %v699, %v694
        %v701 = vand.u32 2147483647, %v694
        %vm702 = vcmp.lt.f32.partialorder %v701, 0.0004427343
        %v703 = vsel %vm702, %v700, %v697
        %v704 = vadd.f32 %v688, %v703
        %v705 = vsel %vm689, %v690, %v704
        %v706 = vpack.c.bf16 %v705, %v705
        %v707 = vld [vmem:[%s5] sm:$0xf]
        %v708 = vld [vmem:[%s5 + $0x4] sm:$0xf]
        %v709 = vld [vmem:[%s5 + $0x8] sm:$0xf]
        %v710 = vld [vmem:[%s5 + $0xc] sm:$0xf]
        %v711 = vld [vmem:[%s5 + $0x10] sm:$0xf]
        %v712 = vld [vmem:[%s5 + $0x14] sm:$0xf]
        %v713 = vld [vmem:[%s5 + $0x18] sm:$0xf]
        %v714 = vld [vmem:[%s5 + $0x1c] sm:$0xf]
        %v715 = vld [vmem:[%s6] sm:$0x1]
        %v717 = vlaneseq
        %v718 = vshrl.u32 %v717, 7
        %v719 = vsub.s32 0, %v718
        %v720 = vrot.slane %v715, %v719
        %v730 = vunpack.c.l.b16 %v707
        %v731 = vunpack.c.l.b16 %v708
        %v732 = vunpack.c.l.b16 %v709
        %v733 = vunpack.c.l.b16 %v710
        %v734 = vunpack.c.l.b16 %v711
        %v735 = vunpack.c.l.b16 %v712
        %v736 = vunpack.c.l.b16 %v713
        %v737 = vunpack.c.l.b16 %v714
        %v738 = vpack.c.b16 %v731, %v730
        %v739 = vpack.c.b16 %v733, %v732
        %v740 = vpack.c.b16 %v735, %v734
        %v741 = vpack.c.b16 %v737, %v736
        %v747 = vsel %vm551, %v706, 0
        %749 = vmatprep.subr.bf16.mxu0 0
        %750 = vmatpush1.bf16.msra.mxu0 %v738
        %751 = vmatprep.subr.bf16.mxu0 0
        %752 = vmatpush1.bf16.msra.mxu0 %v739
        %753 = vmatprep.subr.bf16.mxu0 0
        %754 = vmatpush1.bf16.msra.mxu0 %v740
        %755 = vmatprep.subr.bf16.mxu0 0
        %756 = vmatpush1.bf16.msra.mxu0 %v741
        %757 = vmatprep.subr.bf16.mxu0 0
        %758 = vmatpush1.bf16.msra.mxu0 0
        %759 = vmatprep.subr.bf16.mxu0 0
        %760 = vmatpush1.bf16.msra.mxu0 0
        %761 = vmatprep.subr.bf16.mxu0 0
        %762 = vmatpush1.bf16.msra.mxu0 0
        %763 = vmatprep.subr.bf16.mxu0 0
        %764 = vmatpush1.bf16.msra.mxu0 0
        %765 = vmatprep.subr.bf16.mxu0 0
        %766 = vmatpush1.bf16.msra.mxu0 0
        %767 = vmatprep.subr.bf16.mxu0 0
        %768 = vmatpush1.bf16.msra.mxu0 0
        %769 = vmatprep.subr.bf16.mxu0 0
        %770 = vmatpush1.bf16.msra.mxu0 0
        %771 = vmatprep.subr.bf16.mxu0 0
        %772 = vmatpush1.bf16.msra.mxu0 0
        %773 = vmatprep.subr.bf16.mxu0 0
        %774 = vmatpush1.bf16.msra.mxu0 0
        %775 = vmatprep.subr.bf16.mxu0 0
        %776 = vmatpush1.bf16.msra.mxu0 0
        %777 = vmatprep.subr.bf16.mxu0 0
        %778 = vmatpush1.bf16.msra.mxu0 0
        %779 = vmatprep.subr.bf16.mxu0 0
        %780 = vmatpush1.bf16.msra.mxu0 0
        %781 = vmatprep.mubr.bf16.mxu0 0
        %782 = vmatmul.mubr.bf16.gmra.mrb[0].mxu0 %v747
        %v783 = vpop.f32.mrb[0].mxu0
        %v784 = vadd.f32 %v720, %v783
        %v785 = vpop.f32.mrb[0].mxu0
        %v786 = vpop.f32.mrb[0].mxu0
        %v787 = vpop.f32.mrb[0].mxu0
        %788 = vdwg.mxu0
        %v789 = vmax.f32 %v784, 0.0
        %vm790 = vcmp.ne.f32.partialorder %v784, %v784
        %v791 = vadd.f32 %v784, 0.0
        %v792 = vand.u32 2147483647, %v784
        %v793 = vsub.f32 0.0, %v792
        %v794 = vmul.f32 %v793, 1.442695
        %v795 = vpow.pop %v794
        %v796 = vadd.f32 %v795, 1.0
        %v797 = vlog2.pop %v796
        %v798 = vmul.f32 %v797, 0.6931472
        %v799 = vmul.f32 -0.5, %v795
        %v800 = vadd.f32 %v799, 1.0
        %v801 = vmul.f32 %v800, %v795
        %v802 = vand.u32 2147483647, %v795
        %vm803 = vcmp.lt.f32.partialorder %v802, 0.0004427343
        %v804 = vsel %vm803, %v801, %v798
        %v805 = vadd.f32 %v789, %v804
        %v806 = vsel %vm790, %v791, %v805
        %v807 = vadd.f32 %v437, %v806
        %v808 = vpack.c.bf16 %v807, %v807
        %v809 = vld [vmem:[%s9] sm:$0xf]
        %v810 = vld [vmem:[%s9 + $0x4] sm:$0xf]
        %v811 = vld [vmem:[%s9 + $0x8] sm:$0xf]
        %v812 = vld [vmem:[%s9 + $0xc] sm:$0xf]
        %v813 = vld [vmem:[%s10] sm:$0x1]
        %v815 = vlaneseq
        %v816 = vshrl.u32 %v815, 7
        %v817 = vsub.s32 0, %v816
        %v818 = vrot.slane %v813, %v817
        %v824 = vunpack.c.l.b16 %v809
        %v825 = vunpack.c.l.b16 %v810
        %v826 = vunpack.c.l.b16 %v811
        %v827 = vunpack.c.l.b16 %v812
        %v828 = vpack.c.b16 %v825, %v824
        %v829 = vpack.c.b16 %v827, %v826
        %v833 = vsel %vm462, %v808, 0
        %835 = vmatprep.subr.bf16.mxu0 0
        %836 = vmatpush1.bf16.msra.mxu0 %v828
        %837 = vmatprep.subr.bf16.mxu0 0
        %838 = vmatpush1.bf16.msra.mxu0 %v829
        %839 = vmatprep.subr.bf16.mxu0 0
        %840 = vmatpush1.bf16.msra.mxu0 0
        %841 = vmatprep.subr.bf16.mxu0 0
        %842 = vmatpush1.bf16.msra.mxu0 0
        %843 = vmatprep.subr.bf16.mxu0 0
        %844 = vmatpush1.bf16.msra.mxu0 0
        %845 = vmatprep.subr.bf16.mxu0 0
        %846 = vmatpush1.bf16.msra.mxu0 0
        %847 = vmatprep.subr.bf16.mxu0 0
        %848 = vmatpush1.bf16.msra.mxu0 0
        %849 = vmatprep.subr.bf16.mxu0 0
        %850 = vmatpush1.bf16.msra.mxu0 0
        %851 = vmatprep.subr.bf16.mxu0 0
        %852 = vmatpush1.bf16.msra.mxu0 0
        %853 = vmatprep.subr.bf16.mxu0 0
        %854 = vmatpush1.bf16.msra.mxu0 0
        %855 = vmatprep.subr.bf16.mxu0 0
        %856 = vmatpush1.bf16.msra.mxu0 0
        %857 = vmatprep.subr.bf16.mxu0 0
        %858 = vmatpush1.bf16.msra.mxu0 0
        %859 = vmatprep.subr.bf16.mxu0 0
        %860 = vmatpush1.bf16.msra.mxu0 0
        %861 = vmatprep.subr.bf16.mxu0 0
        %862 = vmatpush1.bf16.msra.mxu0 0
        %863 = vmatprep.subr.bf16.mxu0 0
        %864 = vmatpush1.bf16.msra.mxu0 0
        %865 = vmatprep.subr.bf16.mxu0 0
        %866 = vmatpush1.bf16.msra.mxu0 0
        %867 = vmatprep.mubr.bf16.mxu0 0
        %868 = vmatmul.mubr.bf16.gmra.mrb[0].mxu0 %v833
        %v869 = vpop.f32.mrb[0].mxu0
        %v870 = vadd.f32 %v818, %v869
        %v871 = vpop.f32.mrb[0].mxu0
        %v872 = vpop.f32.mrb[0].mxu0
        %v873 = vpop.f32.mrb[0].mxu0
        %874 = vdwg.mxu0
        %v875 = vsel %vm462, %v870, 0.0
        %876 = vadd.xlane.f32.xlu0 %v875
        %v877 = vpop.xlane.xlu0 %876
        %v878 = vmul.f32 %v870, %v870
        %v879 = vsel %vm462, %v878, 0.0
        %880 = vadd.xlane.f32.xlu0 %v879
        %v881 = vpop.xlane.xlu0 %880
        %v882 = vmul.f32 %v877, 0.03125
        %v883 = vmul.f32 %v877, %v882
        %v884 = vsub.f32 %v881, %v883
        %v885 = vmax.f32 %v884, 0.0
        %v886 = vmul.f32 %v885, 0.032258064
        %v887 = vrsqrt.pop %v886
        %v888 = vmul.f32 %v886, %v887
        %vm889 = vcmp.eq.f32.partialorder %v886, inf
        %v890 = vsel %vm889, %v886, %v888
        %vm891 = vcmp.eq.f32.partialorder %v886, 0.0
        %v892 = vand.u32 %v886, 2147483648
        %v893 = vsel %vm891, %v892, %v890
        %v894 = vadd.f32 %v893, 1e-06
        %v895 = vrcp.pop %v894
        %v896 = vld [vmem:[%s11] sm:$0x1]
        %v897 = vsub.f32 %v870, %v882
        %v899 = vlaneseq
        %v900 = vshrl.u32 %v899, 7
        %v901 = vsub.s32 0, %v900
        %v902 = vrot.slane %v896, %v901
        %v904 = vmul.f32 %v902, %v897
        %v905 = vmul.f32 %v904, %v895
        %v906 = vld [vmem:[%s12] sm:$0x1]
        %v908 = vlaneseq
        %v909 = vshrl.u32 %v908, 7
        %v910 = vsub.s32 0, %v909
        %v911 = vrot.slane %v906, %v910
        %v913 = vadd.f32 %v905, %v911
        %914 = vst.msk [vmem:[%s431] sm:$0xff] %vm462, %v913
        %s915 = sand.u32 %s313, 1
        %s916 = scalar_lea.sflag [#allocation3], %s915
        %s917 = sand.u32 %s313, 1
        %s918 = smul.addr %s917, 8
        %s919 = scalar_lea.vmem [#allocation2], %s918
        // Predicated region
        $region73: #{tpu_custom_call.1} parent=71 // pred_check
          %p920 = pneg %p323
        $region74: #{tpu_custom_call.1} parent=71 // pred_check_branch
          %922 = sbr.rel (%p920) target = $region76
        $region75: #{tpu_custom_call.1} parent=71 // pred_region
          %s924 = ssub.s32 128, 128
          %925 = vsyncadd %s916, %s924
          %s926 = smul.addr %s27, 128
          %s927 = scalar_lea.hbm %s13, %s926
          %s929 = sshll.u32 %s919, 4
          %s930 = int_to_ptr.vmem [resolvable:$true] %s929
          %932 = dma.vmem_to_hbm [thread:$0]  %s930, 128, %s927, %s916
        $region76: #{tpu_custom_call.1} parent=71 // pred_fallthru
          _
      $region72: #{tpu_custom_call.1} parent=5 // pred_fallthru
        _
      %p933 = scmp.le.s32.totalorder 2, %s22
      // Predicated region
      $region77: #{tpu_custom_call.1} parent=5 // pred_check
        %p934 = pneg %p933
      $region78: #{tpu_custom_call.1} parent=5 // pred_check_branch
        %936 = sbr.rel (%p934) target = $region80
      $region79: #{tpu_custom_call.1} parent=5 // pred_region
        %s937 = ssub.s32 %s22, 2
        // Predicated region
        $region81: #{tpu_custom_call.1} parent=79 // pred_check
          %p938 = pneg %p329
        $region82: #{tpu_custom_call.1} parent=79 // pred_check_branch
          %940 = sbr.rel (%p938) target = $region84
        $region83: #{tpu_custom_call.1} parent=79 // pred_region
          %s941 = sand.u32 %s314, 1
          %s942 = scalar_lea.sflag [#allocation3], %s941
          %s943 = sand.u32 %s314, 1
          %s944 = smul.addr %s943, 8
          %s945 = scalar_lea.vmem [#allocation2], %s944
          %946 = dma.done %s942, 128
        $region84: #{tpu_custom_call.1} parent=79 // pred_fallthru
          _
      $region80: #{tpu_custom_call.1} parent=5 // pred_fallthru
        _
    $region6: #{tpu_custom_call.1} parent=1 // loop_footer
      %s26 = sadd.s32 1, %s22
    $region7: #{tpu_custom_call.1} parent=1 // loop_footer_branch
      %21 = sbr.rel target = $region3
    $region8: #{tpu_custom_call.1} parent=1 // loop_exit
      _
    %947 = vsyncpa [#allocation3], 1
    %s948 = scalar_lea.sflag [#allocation3], 1
    %949 = vsyncpa %s948, 1

</llo_original>
